<compile_context>
chip_gen: v7x
topology: tpu7x:2x2x1
jax: 0.10.0
libtpu: 0.0.40
codegen_flags: <defaults>
</compile_context>

<pallas_src>
import math
import functools

import jax
import jax.numpy as jnp
from jax import lax
from jax.experimental import pallas as pl
from jax.experimental.pallas import tpu as pltpu


def _round_up(x, m):
    return (x + m - 1) // m * m


def _pad2(a, rows, cols):
    """Zero-pad a 2-D array up to (rows, cols). No-op if already that shape."""
    pr, pc = rows - a.shape[0], cols - a.shape[1]
    if pr == 0 and pc == 0:
        return a
    return jnp.pad(a, ((0, pr), (0, pc)))


def _mapping_kernel(z_ref, c_ref,
                    we_ref, be_ref,
                    w0z_ref, w0y_ref, b0_ref,
                    w1_ref, b1_ref,
                    out_ref,
                    *, z_dim, w_dim, embed_gain, fc0_gain, fc1_gain):
    f32 = jnp.float32

    def dot(a_f32, w_ref):
        # [TM, K] @ [K, N] on the MXU, f32 accumulation. Weight is already [K, N]
        # (pre-transposed in the wrapper), so no in-kernel transpose is needed.
        return lax.dot_general(
            a_f32.astype(w_ref.dtype), w_ref[...],
            dimension_numbers=(((1,), (0,)), ((), ())),
            preferred_element_type=f32)

    # --- normalize z ---------------------------------------------------------
    # Padded lanes of z are zero, so sum() equals the true sum; divide by the
    # true z_dim (not the padded width) to reproduce mean().
    x = z_ref[...].astype(f32)
    x = x * lax.rsqrt(jnp.sum(x * x, axis=1, keepdims=True) * (1.0 / z_dim) + 1e-8)

    # --- embed(c): linear FC, lr_multiplier = 1 (bias gain = 1) --------------
    # Scalar weight gain applied to the small [TM, Cp] activation, not the weight.
    c = c_ref[...].astype(f32)
    y = dot(c * embed_gain, we_ref) + be_ref[...]
    # Padded output lanes of the embed are exactly zero (zero weight cols + zero
    # bias pad), so the sum over padded lanes equals the sum over w_dim.
    y = y * lax.rsqrt(jnp.sum(y * y, axis=1, keepdims=True) * (1.0 / w_dim) + 1e-8)

    # --- fc0 on cat([x, y]): split matmul (no in-kernel concat) --------------
    h = dot(x * fc0_gain, w0z_ref) + dot(y * fc0_gain, w0y_ref) + b0_ref[...]
    h = jnp.where(h >= 0, h, 0.2 * h)          # leaky_relu(0.2)

    # --- fc1 ------------------------------------------------------------------
    w = dot(h * fc1_gain, w1_ref) + b1_ref[...]
    w = jnp.where(w >= 0, w, 0.2 * w)

    out_ref[...] = w.astype(out_ref.dtype)


def mapping_network_forward(z, c, params, *, z_dim, c_dim, w_dim,
                            lr_multiplier=0.01,
                            compute_dtype=jnp.bfloat16,
                            block_m=None):
    """params: dict with we (w_dim,c_dim), be (1,w_dim), w0 (w_dim, z_dim+w_dim),
    b0 (1,w_dim), w1 (w_dim,w_dim), b1 (1,w_dim) — torch [out, in] layout."""
    B = z.shape[0]
    LANE = 128

    # Lane-dense padded feature dims (multiples of 128).
    Zp = _round_up(z_dim, LANE)
    Cp = _round_up(c_dim, LANE)
    Wp = _round_up(w_dim, LANE)

    # Batch tile: multiple of 16 (bf16 sublane pack), capped at 256 (MXU M on v6e/v7x).
    tm = block_m if block_m is not None else min(256, _round_up(B, 16))
    Bp = _round_up(B, tm)

    embed_gain = 1.0 / math.sqrt(c_dim)                   # embed lr_multiplier = 1
    fc0_gain = lr_multiplier / math.sqrt(z_dim + w_dim)   # in_features of fc0
    fc1_gain = lr_multiplier / math.sqrt(w_dim)

    f32 = jnp.float32

    # ---- One-time parameter prep (outside the kernel) ------------------------
    # Transpose weights to [K, N] (output on the lane axis), cast matmul operands
    # to compute_dtype, pre-fold the bias lr-gain, zero-pad to lane/sublane tiles.
    we_t = _pad2(params["we"].astype(compute_dtype).T, Cp, Wp)           # [Cp, Wp]
    w0 = params["w0"].astype(compute_dtype)
    w0z_t = _pad2(w0[:, :z_dim].T, Zp, Wp)                               # [Zp, Wp]
    w0y_t = _pad2(w0[:, z_dim:].T, Wp, Wp)                               # [Wp, Wp]
    w1_t = _pad2(params["w1"].astype(compute_dtype).T, Wp, Wp)           # [Wp, Wp]
    be = _pad2(params["be"].astype(f32), 1, Wp)                          # bias gain 1
    b0 = _pad2((params["b0"] * lr_multiplier).astype(f32), 1, Wp)        # gain pre-folded
    b1 = _pad2((params["b1"] * lr_multiplier).astype(f32), 1, Wp)

    # Activations stay f32 in HBM; normalization needs full precision inputs.
    z_p = _pad2(z.astype(f32), Bp, Zp)
    c_p = _pad2(c.astype(f32), Bp, Cp)

    def act_spec(cols):
        return pl.BlockSpec((tm, cols), lambda i: (i, 0))

    def resident_spec(shape):
        # Constant block index -> stays VMEM-resident across all grid steps.
        return pl.BlockSpec(shape, lambda i: (0, 0))

    kernel = functools.partial(
        _mapping_kernel,
        z_dim=z_dim, w_dim=w_dim,
        embed_gain=embed_gain, fc0_gain=fc0_gain, fc1_gain=fc1_gain,
    )

    out_p = pl.pallas_call(
        kernel,
        out_shape=jax.ShapeDtypeStruct((Bp, Wp), jnp.float32),
        grid=(Bp // tm,),
        in_specs=[
            act_spec(Zp),                 # z tile
            act_spec(Cp),                 # c tile
            resident_spec((Cp, Wp)),      # embed weight
            resident_spec((1, Wp)),       # embed bias
            resident_spec((Zp, Wp)),      # fc0 weight (z columns)
            resident_spec((Wp, Wp)),      # fc0 weight (y columns)
            resident_spec((1, Wp)),       # fc0 bias (lr-gain folded)
            resident_spec((Wp, Wp)),      # fc1 weight
            resident_spec((1, Wp)),       # fc1 bias (lr-gain folded)
        ],
        out_specs=act_spec(Wp),
        compiler_params=pltpu.CompilerParams(
            dimension_semantics=("parallel",),        # shard batch tiles across TCs
            vmem_limit_bytes=48 * 1024 * 1024,        # headroom under v7x's 64 MiB
        ),
    )(z_p, c_p, we_t, be, w0z_t, w0y_t, b0, w1_t, b1)

    return out_p[:B, :w_dim]


def mapping_network_reference(z, c, params, *, z_dim, c_dim, w_dim, lr_multiplier=0.01):
    """Pure-JAX fp32 reference mirroring the PyTorch forward, for validation."""
    x = z.astype(jnp.float32)
    x = x * jax.lax.rsqrt(jnp.mean(x * x, axis=1, keepdims=True) + 1e-8)
    y = c.astype(jnp.float32) @ (params["we"] * (1.0 / math.sqrt(c_dim))).T + params["be"]
    y = y * jax.lax.rsqrt(jnp.mean(y * y, axis=1, keepdims=True) + 1e-8)
    h = jnp.concatenate([x, y], axis=1)
    g0 = lr_multiplier / math.sqrt(z_dim + w_dim)
    h = h @ (params["w0"] * g0).T + params["b0"] * lr_multiplier
    h = jnp.where(h >= 0, h, 0.2 * h)
    g1 = lr_multiplier / math.sqrt(w_dim)
    w = h @ (params["w1"] * g1).T + params["b1"] * lr_multiplier
    w = jnp.where(w >= 0, w, 0.2 * w)
    return w


if __name__ == "__main__":
    # Small deterministic config (multiple batch tiles to exercise the grid).
    B, Z_DIM, C_DIM, W_DIM = 32, 32, 8, 32
    LR_MULT = 0.01

    key = jax.random.PRNGKey(0)
    kz, kc, kwe, kw0, kw1 = jax.random.split(key, 5)

    z = jax.random.normal(kz, (B, Z_DIM), dtype=jnp.float32)
    c = jax.random.normal(kc, (B, C_DIM), dtype=jnp.float32)

    # Parameter init mirrors FullyConnectedLayer.__init__ (weight_init/lr_multiplier
    # scale folded into the stored weight; runtime gains applied in the kernel).
    params = {
        "we": jax.random.normal(kwe, (W_DIM, C_DIM), dtype=jnp.float32),          # embed, lr=1
        "be": jnp.zeros((1, W_DIM), dtype=jnp.float32),
        "w0": jax.random.normal(kw0, (W_DIM, Z_DIM + W_DIM), dtype=jnp.float32) * (1.0 / LR_MULT),
        "b0": jnp.zeros((1, W_DIM), dtype=jnp.float32),
        "w1": jax.random.normal(kw1, (W_DIM, W_DIM), dtype=jnp.float32) * (1.0 / LR_MULT),
        "b1": jnp.zeros((1, W_DIM), dtype=jnp.float32),
    }

    ref = mapping_network_reference(z, c, params, z_dim=Z_DIM, c_dim=C_DIM,
                                    w_dim=W_DIM, lr_multiplier=LR_MULT)

    # Exact-semantics check: f32 matmul path.
    out_f32 = mapping_network_forward(z, c, params, z_dim=Z_DIM, c_dim=C_DIM,
                                      w_dim=W_DIM, lr_multiplier=LR_MULT,
                                      compute_dtype=jnp.float32, block_m=16)
    out_f32 = jax.block_until_ready(out_f32)
    assert out_f32.shape == (B, W_DIM)
    assert jnp.allclose(out_f32, ref, atol=1e-4, rtol=1e-4), "f32 path mismatch vs reference"

    # Fast path: bf16 MXU inputs, f32 accumulation / normalization / epilogue.
    out_bf16 = mapping_network_forward(z, c, params, z_dim=Z_DIM, c_dim=C_DIM,
                                       w_dim=W_DIM, lr_multiplier=LR_MULT,
                                       compute_dtype=jnp.bfloat16, block_m=16)
    out_bf16 = jax.block_until_ready(out_bf16)
    assert out_bf16.shape == (B, W_DIM)
    assert jnp.allclose(out_bf16, ref, atol=5e-2, rtol=5e-2), "bf16 path mismatch vs reference"

    print("KERNEL_OK")
</pallas_src>

<mosaic_0001>
module attributes {stable_mosaic.version = 11 : i64} {
  func.func @_mapping_kernel(%arg0: i32, %arg1: memref<16x128xf32, #tpu.memory_space<vmem>>, %arg2: memref<16x128xf32, #tpu.memory_space<vmem>>, %arg3: memref<128x128xf32, #tpu.memory_space<vmem>>, %arg4: memref<1x128xf32, #tpu.memory_space<vmem>>, %arg5: memref<128x128xf32, #tpu.memory_space<vmem>>, %arg6: memref<128x128xf32, #tpu.memory_space<vmem>>, %arg7: memref<1x128xf32, #tpu.memory_space<vmem>>, %arg8: memref<128x128xf32, #tpu.memory_space<vmem>>, %arg9: memref<1x128xf32, #tpu.memory_space<vmem>>, %arg10: memref<16x128xf32, #tpu.memory_space<vmem>>) attributes {dimension_semantics = [#tpu.dimension_semantics<parallel>], iteration_bounds = array<i64: 2>, scalar_prefetch = 0 : i64, scratch_operands = 0 : i64, tpu.core_type = #tpu.core_type<tc>, window_params = [{transform_indices = @transform_0, window_bounds = array<i64: 16, 128>}, {transform_indices = @transform_1, window_bounds = array<i64: 16, 128>}, {pipeline_mode = #tpu.pipeline_mode<synchronous>, transform_indices = @transform_2, window_bounds = array<i64: 128, 128>}, {pipeline_mode = #tpu.pipeline_mode<synchronous>, transform_indices = @transform_3, window_bounds = array<i64: 1, 128>}, {pipeline_mode = #tpu.pipeline_mode<synchronous>, transform_indices = @transform_4, window_bounds = array<i64: 128, 128>}, {pipeline_mode = #tpu.pipeline_mode<synchronous>, transform_indices = @transform_5, window_bounds = array<i64: 128, 128>}, {pipeline_mode = #tpu.pipeline_mode<synchronous>, transform_indices = @transform_6, window_bounds = array<i64: 1, 128>}, {pipeline_mode = #tpu.pipeline_mode<synchronous>, transform_indices = @transform_7, window_bounds = array<i64: 128, 128>}, {pipeline_mode = #tpu.pipeline_mode<synchronous>, transform_indices = @transform_8, window_bounds = array<i64: 1, 128>}, {transform_indices = @transform_9, window_bounds = array<i64: 16, 128>}]} {
    %c0 = arith.constant 0 : index
    %c0_0 = arith.constant 0 : index
    %0 = vector.load %arg1[%c0, %c0_0] : memref<16x128xf32, #tpu.memory_space<vmem>>, vector<16x128xf32>
    %1 = arith.mulf %0, %0 : vector<16x128xf32>
    %cst = arith.constant dense<0.000000e+00> : vector<16xf32>
    %2 = vector.multi_reduction <add>, %1, %cst [1] : vector<16x128xf32> to vector<16xf32>
    %3 = vector.shape_cast %2 : vector<16xf32> to vector<16x1xf32>
    %cst_1 = arith.constant 3.125000e-02 : f32
    %4 = vector.broadcast %cst_1 : f32 to vector<16x1xf32>
    %5 = arith.mulf %3, %4 : vector<16x1xf32>
    %cst_2 = arith.constant 9.99999993E-9 : f32
    %6 = vector.broadcast %cst_2 : f32 to vector<16x1xf32>
    %7 = arith.addf %5, %6 : vector<16x1xf32>
    %8 = math.rsqrt %7 : vector<16x1xf32>
    %9 = vector.broadcast %8 : vector<16x1xf32> to vector<16x128xf32>
    %10 = arith.mulf %0, %9 : vector<16x128xf32>
    %c0_3 = arith.constant 0 : index
    %c0_4 = arith.constant 0 : index
    %11 = vector.load %arg2[%c0_3, %c0_4] : memref<16x128xf32, #tpu.memory_space<vmem>>, vector<16x128xf32>
    %cst_5 = arith.constant 0.353553385 : f32
    %12 = vector.broadcast %cst_5 : f32 to vector<16x128xf32>
    %13 = arith.mulf %11, %12 : vector<16x128xf32>
    %c0_6 = arith.constant 0 : index
    %c0_7 = arith.constant 0 : index
    %14 = vector.load %arg3[%c0_6, %c0_7] : memref<128x128xf32, #tpu.memory_space<vmem>>, vector<128x128xf32>
    %cst_8 = arith.constant dense<0.000000e+00> : vector<16x128xf32>
    %15 = tpu.matmul %13, %14, %cst_8 {dimension_numbers = #tpu.dot_dimension_numbers<[1], [0], [0], [1], [0, 0, 1, 1], [], []>} : vector<16x128xf32>, vector<128x128xf32>, vector<16x128xf32> -> vector<16x128xf32>
    %c0_9 = arith.constant 0 : index
    %c0_10 = arith.constant 0 : index
    %16 = vector.load %arg4[%c0_9, %c0_10] : memref<1x128xf32, #tpu.memory_space<vmem>>, vector<1x128xf32>
    %17 = vector.broadcast %16 : vector<1x128xf32> to vector<16x128xf32>
    %18 = arith.addf %15, %17 : vector<16x128xf32>
    %19 = arith.mulf %18, %18 : vector<16x128xf32>
    %cst_11 = arith.constant dense<0.000000e+00> : vector<16xf32>
    %20 = vector.multi_reduction <add>, %19, %cst_11 [1] : vector<16x128xf32> to vector<16xf32>
    %21 = vector.shape_cast %20 : vector<16xf32> to vector<16x1xf32>
    %cst_12 = arith.constant 3.125000e-02 : f32
    %22 = vector.broadcast %cst_12 : f32 to vector<16x1xf32>
    %23 = arith.mulf %21, %22 : vector<16x1xf32>
    %cst_13 = arith.constant 9.99999993E-9 : f32
    %24 = vector.broadcast %cst_13 : f32 to vector<16x1xf32>
    %25 = arith.addf %23, %24 : vector<16x1xf32>
    %26 = math.rsqrt %25 : vector<16x1xf32>
    %27 = vector.broadcast %26 : vector<16x1xf32> to vector<16x128xf32>
    %28 = arith.mulf %18, %27 : vector<16x128xf32>
    %cst_14 = arith.constant 1.250000e-03 : f32
    %29 = vector.broadcast %cst_14 : f32 to vector<16x128xf32>
    %30 = arith.mulf %10, %29 : vector<16x128xf32>
    %c0_15 = arith.constant 0 : index
    %c0_16 = arith.constant 0 : index
    %31 = vector.load %arg5[%c0_15, %c0_16] : memref<128x128xf32, #tpu.memory_space<vmem>>, vector<128x128xf32>
    %cst_17 = arith.constant dense<0.000000e+00> : vector<16x128xf32>
    %32 = tpu.matmul %30, %31, %cst_17 {dimension_numbers = #tpu.dot_dimension_numbers<[1], [0], [0], [1], [0, 0, 1, 1], [], []>} : vector<16x128xf32>, vector<128x128xf32>, vector<16x128xf32> -> vector<16x128xf32>
    %cst_18 = arith.constant 1.250000e-03 : f32
    %33 = vector.broadcast %cst_18 : f32 to vector<16x128xf32>
    %34 = arith.mulf %28, %33 : vector<16x128xf32>
    %c0_19 = arith.constant 0 : index
    %c0_20 = arith.constant 0 : index
    %35 = vector.load %arg6[%c0_19, %c0_20] : memref<128x128xf32, #tpu.memory_space<vmem>>, vector<128x128xf32>
    %cst_21 = arith.constant dense<0.000000e+00> : vector<16x128xf32>
    %36 = tpu.matmul %34, %35, %cst_21 {dimension_numbers = #tpu.dot_dimension_numbers<[1], [0], [0], [1], [0, 0, 1, 1], [], []>} : vector<16x128xf32>, vector<128x128xf32>, vector<16x128xf32> -> vector<16x128xf32>
    %37 = arith.addf %32, %36 : vector<16x128xf32>
    %c0_22 = arith.constant 0 : index
    %c0_23 = arith.constant 0 : index
    %38 = vector.load %arg7[%c0_22, %c0_23] : memref<1x128xf32, #tpu.memory_space<vmem>>, vector<1x128xf32>
    %39 = vector.broadcast %38 : vector<1x128xf32> to vector<16x128xf32>
    %40 = arith.addf %37, %39 : vector<16x128xf32>
    %cst_24 = arith.constant 0.000000e+00 : f32
    %41 = vector.broadcast %cst_24 : f32 to vector<16x128xf32>
    %42 = arith.cmpf oge, %40, %41 : vector<16x128xf32>
    %cst_25 = arith.constant 2.000000e-01 : f32
    %43 = vector.broadcast %cst_25 : f32 to vector<16x128xf32>
    %44 = arith.mulf %43, %40 : vector<16x128xf32>
    %45 = arith.select %42, %40, %44 : vector<16x128xi1>, vector<16x128xf32>
    %cst_26 = arith.constant 0.00176776689 : f32
    %46 = vector.broadcast %cst_26 : f32 to vector<16x128xf32>
    %47 = arith.mulf %45, %46 : vector<16x128xf32>
    %c0_27 = arith.constant 0 : index
    %c0_28 = arith.constant 0 : index
    %48 = vector.load %arg8[%c0_27, %c0_28] : memref<128x128xf32, #tpu.memory_space<vmem>>, vector<128x128xf32>
    %cst_29 = arith.constant dense<0.000000e+00> : vector<16x128xf32>
    %49 = tpu.matmul %47, %48, %cst_29 {dimension_numbers = #tpu.dot_dimension_numbers<[1], [0], [0], [1], [0, 0, 1, 1], [], []>} : vector<16x128xf32>, vector<128x128xf32>, vector<16x128xf32> -> vector<16x128xf32>
    %c0_30 = arith.constant 0 : index
    %c0_31 = arith.constant 0 : index
    %50 = vector.load %arg9[%c0_30, %c0_31] : memref<1x128xf32, #tpu.memory_space<vmem>>, vector<1x128xf32>
    %51 = vector.broadcast %50 : vector<1x128xf32> to vector<16x128xf32>
    %52 = arith.addf %49, %51 : vector<16x128xf32>
    %cst_32 = arith.constant 0.000000e+00 : f32
    %53 = vector.broadcast %cst_32 : f32 to vector<16x128xf32>
    %54 = arith.cmpf oge, %52, %53 : vector<16x128xf32>
    %cst_33 = arith.constant 2.000000e-01 : f32
    %55 = vector.broadcast %cst_33 : f32 to vector<16x128xf32>
    %56 = arith.mulf %55, %52 : vector<16x128xf32>
    %57 = arith.select %54, %52, %56 : vector<16x128xi1>, vector<16x128xf32>
    %c0_34 = arith.constant 0 : index
    %c0_35 = arith.constant 0 : index
    %58 = vector.load %arg10[%c0_34, %c0_35] : memref<16x128xf32, #tpu.memory_space<vmem>>, vector<16x128xf32>
    tpu.vector_store %arg10[%c0_34, %c0_35], %57 {strides = array<i32>} : memref<16x128xf32, #tpu.memory_space<vmem>>, vector<16x128xf32>,
    return
  }
  func.func @transform_0(%arg0: i32) -> (i32, i32) {
    %c0_i32 = arith.constant 0 : i32
    %c0_i32_0 = arith.constant 0 : i32
    return %arg0, %c0_i32 : i32, i32
  }
  func.func @transform_1(%arg0: i32) -> (i32, i32) {
    %c0_i32 = arith.constant 0 : i32
    %c0_i32_0 = arith.constant 0 : i32
    return %arg0, %c0_i32 : i32, i32
  }
  func.func @transform_2(%arg0: i32) -> (i32, i32) {
    %c0_i32 = arith.constant 0 : i32
    %c0_i32_0 = arith.constant 0 : i32
    %c0_i32_1 = arith.constant 0 : i32
    return %c0_i32, %c0_i32_0 : i32, i32
  }
  func.func @transform_3(%arg0: i32) -> (i32, i32) {
    %c0_i32 = arith.constant 0 : i32
    %c0_i32_0 = arith.constant 0 : i32
    %c0_i32_1 = arith.constant 0 : i32
    return %c0_i32, %c0_i32_0 : i32, i32
  }
  func.func @transform_4(%arg0: i32) -> (i32, i32) {
    %c0_i32 = arith.constant 0 : i32
    %c0_i32_0 = arith.constant 0 : i32
    %c0_i32_1 = arith.constant 0 : i32
    return %c0_i32, %c0_i32_0 : i32, i32
  }
  func.func @transform_5(%arg0: i32) -> (i32, i32) {
    %c0_i32 = arith.constant 0 : i32
    %c0_i32_0 = arith.constant 0 : i32
    %c0_i32_1 = arith.constant 0 : i32
    return %c0_i32, %c0_i32_0 : i32, i32
  }
  func.func @transform_6(%arg0: i32) -> (i32, i32) {
    %c0_i32 = arith.constant 0 : i32
    %c0_i32_0 = arith.constant 0 : i32
    %c0_i32_1 = arith.constant 0 : i32
    return %c0_i32, %c0_i32_0 : i32, i32
  }
  func.func @transform_7(%arg0: i32) -> (i32, i32) {
    %c0_i32 = arith.constant 0 : i32
    %c0_i32_0 = arith.constant 0 : i32
    %c0_i32_1 = arith.constant 0 : i32
    return %c0_i32, %c0_i32_0 : i32, i32
  }
  func.func @transform_8(%arg0: i32) -> (i32, i32) {
    %c0_i32 = arith.constant 0 : i32
    %c0_i32_0 = arith.constant 0 : i32
    %c0_i32_1 = arith.constant 0 : i32
    return %c0_i32, %c0_i32_0 : i32, i32
  }
  func.func @transform_9(%arg0: i32) -> (i32, i32) {
    %c0_i32 = arith.constant 0 : i32
    %c0_i32_0 = arith.constant 0 : i32
    return %arg0, %c0_i32 : i32, i32
  }
}

</mosaic_0001>

<llo_original>
// kernel: tpu_custom_call.1
$region0: #{tpu_custom_call.1}
  #allocation0 [shape = 'u32[]', space=smem, size = 0x4, offset = 0x4, fixed_abs, tag = 'smem constant byte address 0x4 - core index']
  #allocation1 [shape = 'u32[144,128]{1,0:T(1,128)}', space=vmem, size = 0x12000, scoped, tag = 'internal scratch']
  %s0 = inlined_call_operand.hbm [shape: f32[32,128], index: 0, kind: input, shape index: {}]
  %s1 = inlined_call_operand.hbm [shape: f32[32,128], index: 1, kind: input, shape index: {}]
  %s2 = inlined_call_operand.hbm [shape: f32[128,128], index: 2, kind: input, shape index: {}]
  %s3 = inlined_call_operand.vmem [shape: f32[1,128], index: 3, kind: input, shape index: {}]
  %s4 = inlined_call_operand.hbm [shape: f32[128,128], index: 4, kind: input, shape index: {}]
  %s5 = inlined_call_operand.hbm [shape: f32[128,128], index: 5, kind: input, shape index: {}]
  %s6 = inlined_call_operand.vmem [shape: f32[1,128], index: 6, kind: input, shape index: {}]
  %s7 = inlined_call_operand.hbm [shape: f32[128,128], index: 7, kind: input, shape index: {}]
  %s8 = inlined_call_operand.vmem [shape: f32[1,128], index: 8, kind: input, shape index: {}]
  %s9 = inlined_call_operand.hbm [shape: f32[32,128], index: 9, kind: output, shape index: {}]
  %s10 = sld [smem:[#allocation0]]
  $region93: #{tpu_custom_call.1} parent=0
    _
  %s12 = ssub.s32 1, %s10
  %s13 = scalar_select 0, %s12, %s10
  $region1: #{tpu_custom_call.1} parent=0
    #allocation2 [shape = 'u8[16384]{0}', space=vmem, size = 0x4000, scoped, tag = 'input window, operand 0']
    #allocation3 [shape = 's32[2]{0}', space=sflag, size = 0x8, scoped, tag = 'scoped memory for tpu_custom_call.1']
    #allocation4 [shape = 's32[2]{0}', space=sflag, size = 0x8, scoped, tag = 'scoped memory for tpu_custom_call.1']
    #allocation5 [shape = 'u8[16384]{0}', space=vmem, size = 0x4000, scoped, tag = 'input window, operand 1']
    #allocation6 [shape = 's32[2]{0}', space=sflag, size = 0x8, scoped, tag = 'scoped memory for tpu_custom_call.1']
    #allocation7 [shape = 'u8[65536]{0}', space=vmem, size = 0x10000, scoped, tag = 'input window, operand 2, single buffered']
    #allocation8 [shape = 'u8[65536]{0}', space=vmem, size = 0x10000, scoped, tag = 'input window, operand 4, single buffered']
    #allocation9 [shape = 's32[1]{0}', space=sflag, size = 0x4, scoped, tag = 'scoped memory for tpu_custom_call.1']
    #allocation10 [shape = 'u8[65536]{0}', space=vmem, size = 0x10000, scoped, tag = 'input window, operand 5, single buffered']
    #allocation11 [shape = 'u8[65536]{0}', space=vmem, size = 0x10000, scoped, tag = 'input window, operand 7, single buffered']
    #allocation12 [shape = 's32[1]{0}', space=sflag, size = 0x4, scoped, tag = 'scoped memory for tpu_custom_call.1']
    #allocation13 [shape = 'u8[16384]{0}', space=vmem, size = 0x4000, scoped, tag = 'output window, operand 0']
    %14 = vsyncpa [#allocation3], 0
    %s15 = scalar_lea.sflag [#allocation3], 1
    %16 = vsyncpa %s15, 0
    %17 = vsyncpa [#allocation6], 0
    %s18 = scalar_lea.sflag [#allocation6], 1
    %19 = vsyncpa %s18, 0
    %20 = vsyncpa [#allocation9], 0
    %21 = vsyncpa [#allocation12], 0
    %22 = vsyncpa [#allocation4], 0
    %s23 = scalar_lea.sflag [#allocation4], 1
    %24 = vsyncpa %s23, 0
    loop: start=0, step=1, limit=4
    $region2: #{tpu_custom_call.1} parent=1 // loop_pre_header
      _
    $region3: #{tpu_custom_call.1} parent=1 // loop_header
      %s26 = sphi 0, %s30
      %p27 = scmp.ge.s32.totalorder %s26, 4
      %s36 = sphi 0, %s38
      %s39 = sphi 0, %s36
      %s40 = sphi 0, %s39
      %s56 = sphi 0, %s40
      %s62 = sphi 0, %s64
      %s65 = sphi 0, %s62
      %s66 = sphi 0, %s65
      %s82 = sphi 0, %s66
      %s86 = sphi 0, %s86
      %s88 = sphi 0, %s86
      %s89 = sphi 0, %s88
      %s103 = sphi 0, %s89
      %s107 = sphi 0, %s107
      %s109 = sphi 0, %s107
      %s110 = sphi 0, %s109
      %s124 = sphi 0, %s110
      %s128 = sphi 0, %s128
      %s130 = sphi 0, %s128
      %s131 = sphi 0, %s130
      %s145 = sphi 0, %s131
      %s149 = sphi 0, %s149
      %s151 = sphi 0, %s149
      %s152 = sphi 0, %s151
      %s166 = sphi 0, %s152
      %s170 = sphi 0, %s170
      %s172 = sphi 0, %s170
      %s173 = sphi 0, %s172
      %s187 = sphi 0, %s173
      %s191 = sphi 0, %s191
      %s193 = sphi 0, %s191
      %s194 = sphi 0, %s193
      %s208 = sphi 0, %s194
      %s212 = sphi 0, %s212
      %s214 = sphi 0, %s212
      %s215 = sphi 0, %s214
      %s229 = sphi 0, %s215
      %s235 = sphi 0, %s237
      %s238 = sphi 0, %s235
      %s239 = sphi 0, %s238
      %s255 = sphi 0, %s239
    $region4: #{tpu_custom_call.1} parent=1 // loop_header_branch
      %29 = sbr.rel (%p27) target = $region8
    $region5: #{tpu_custom_call.1} parent=1 // loop_body
      %s31 = ssub.s32 %s26, 1
      %s32 = ssub.s32 %s26, 2
      %s33 = sadd.s32 %s26, 1
      %s34 = ssub.s32 %s26, %s33
      %p35 = scmp.eq.s32.totalorder %s34, 0
      %s37 = sadd.s32 %s36, 1
      %s38 = scalar_select %p35, %s36, %s37
      %p41 = pneg %p35
      %p42 = scmp.eq.s32.totalorder %s26, 1
      %p43 = por %p41, %p42
      %p44 = scmp.ne.s32.totalorder %s36, %s39
      %p45 = scmp.eq.s32.totalorder %s26, 0
      %p46 = por %p44, %p45
      %p47 = scmp.ne.s32.totalorder %s36, %s39
      %p48 = scmp.eq.s32.totalorder %s31, 1
      %p49 = por %p47, %p48
      %p50 = scmp.ne.s32.totalorder %s39, %s40
      %p51 = scmp.eq.s32.totalorder %s31, 0
      %p52 = por %p50, %p51
      %p53 = scmp.ne.s32.totalorder %s39, %s40
      %p54 = scmp.eq.s32.totalorder %s32, 1
      %p55 = por %p53, %p54
      %p57 = scmp.ne.s32.totalorder %s40, %s56
      %p58 = scmp.eq.s32.totalorder %s32, 0
      %p59 = por %p57, %p58
      %s60 = ssub.s32 %s26, %s33
      %p61 = scmp.eq.s32.totalorder %s60, 0
      %s63 = sadd.s32 %s62, 1
      %s64 = scalar_select %p61, %s62, %s63
      %p67 = pneg %p61
      %p68 = scmp.eq.s32.totalorder %s26, 1
      %p69 = por %p67, %p68
      %p70 = scmp.ne.s32.totalorder %s62, %s65
      %p71 = scmp.eq.s32.totalorder %s26, 0
      %p72 = por %p70, %p71
      %p73 = scmp.ne.s32.totalorder %s62, %s65
      %p74 = scmp.eq.s32.totalorder %s31, 1
      %p75 = por %p73, %p74
      %p76 = scmp.ne.s32.totalorder %s65, %s66
      %p77 = scmp.eq.s32.totalorder %s31, 0
      %p78 = por %p76, %p77
      %p79 = scmp.ne.s32.totalorder %s65, %s66
      %p80 = scmp.eq.s32.totalorder %s32, 1
      %p81 = por %p79, %p80
      %p83 = scmp.ne.s32.totalorder %s66, %s82
      %p84 = scmp.eq.s32.totalorder %s32, 0
      %p85 = por %p83, %p84
      %s87 = sadd.s32 %s86, 1
      %p90 = scmp.eq.s32.totalorder %s26, 1
      %p91 = scmp.ne.s32.totalorder %s86, %s88
      %p92 = scmp.eq.s32.totalorder %s26, 0
      %p93 = por %p91, %p92
      %p94 = scmp.ne.s32.totalorder %s86, %s88
      %p95 = scmp.eq.s32.totalorder %s31, 1
      %p96 = por %p94, %p95
      %p97 = scmp.ne.s32.totalorder %s88, %s89
      %p98 = scmp.eq.s32.totalorder %s31, 0
      %p99 = por %p97, %p98
      %p100 = scmp.ne.s32.totalorder %s88, %s89
      %p101 = scmp.eq.s32.totalorder %s32, 1
      %p102 = por %p100, %p101
      %p104 = scmp.ne.s32.totalorder %s89, %s103
      %p105 = scmp.eq.s32.totalorder %s32, 0
      %p106 = por %p104, %p105
      %s108 = sadd.s32 %s107, 1
      %p111 = scmp.eq.s32.totalorder %s26, 1
      %p112 = scmp.ne.s32.totalorder %s107, %s109
      %p113 = scmp.eq.s32.totalorder %s26, 0
      %p114 = por %p112, %p113
      %p115 = scmp.ne.s32.totalorder %s107, %s109
      %p116 = scmp.eq.s32.totalorder %s31, 1
      %p117 = por %p115, %p116
      %p118 = scmp.ne.s32.totalorder %s109, %s110
      %p119 = scmp.eq.s32.totalorder %s31, 0
      %p120 = por %p118, %p119
      %p121 = scmp.ne.s32.totalorder %s109, %s110
      %p122 = scmp.eq.s32.totalorder %s32, 1
      %p123 = por %p121, %p122
      %p125 = scmp.ne.s32.totalorder %s110, %s124
      %p126 = scmp.eq.s32.totalorder %s32, 0
      %p127 = por %p125, %p126
      %s129 = sadd.s32 %s128, 1
      %p132 = scmp.eq.s32.totalorder %s26, 1
      %p133 = scmp.ne.s32.totalorder %s128, %s130
      %p134 = scmp.eq.s32.totalorder %s26, 0
      %p135 = por %p133, %p134
      %p136 = scmp.ne.s32.totalorder %s128, %s130
      %p137 = scmp.eq.s32.totalorder %s31, 1
      %p138 = por %p136, %p137
      %p139 = scmp.ne.s32.totalorder %s130, %s131
      %p140 = scmp.eq.s32.totalorder %s31, 0
      %p141 = por %p139, %p140
      %p142 = scmp.ne.s32.totalorder %s130, %s131
      %p143 = scmp.eq.s32.totalorder %s32, 1
      %p144 = por %p142, %p143
      %p146 = scmp.ne.s32.totalorder %s131, %s145
      %p147 = scmp.eq.s32.totalorder %s32, 0
      %p148 = por %p146, %p147
      %s150 = sadd.s32 %s149, 1
      %p153 = scmp.eq.s32.totalorder %s26, 1
      %p154 = scmp.ne.s32.totalorder %s149, %s151
      %p155 = scmp.eq.s32.totalorder %s26, 0
      %p156 = por %p154, %p155
      %p157 = scmp.ne.s32.totalorder %s149, %s151
      %p158 = scmp.eq.s32.totalorder %s31, 1
      %p159 = por %p157, %p158
      %p160 = scmp.ne.s32.totalorder %s151, %s152
      %p161 = scmp.eq.s32.totalorder %s31, 0
      %p162 = por %p160, %p161
      %p163 = scmp.ne.s32.totalorder %s151, %s152
      %p164 = scmp.eq.s32.totalorder %s32, 1
      %p165 = por %p163, %p164
      %p167 = scmp.ne.s32.totalorder %s152, %s166
      %p168 = scmp.eq.s32.totalorder %s32, 0
      %p169 = por %p167, %p168
      %s171 = sadd.s32 %s170, 1
      %p174 = scmp.eq.s32.totalorder %s26, 1
      %p175 = scmp.ne.s32.totalorder %s170, %s172
      %p176 = scmp.eq.s32.totalorder %s26, 0
      %p177 = por %p175, %p176
      %p178 = scmp.ne.s32.totalorder %s170, %s172
      %p179 = scmp.eq.s32.totalorder %s31, 1
      %p180 = por %p178, %p179
      %p181 = scmp.ne.s32.totalorder %s172, %s173
      %p182 = scmp.eq.s32.totalorder %s31, 0
      %p183 = por %p181, %p182
      %p184 = scmp.ne.s32.totalorder %s172, %s173
      %p185 = scmp.eq.s32.totalorder %s32, 1
      %p186 = por %p184, %p185
      %p188 = scmp.ne.s32.totalorder %s173, %s187
      %p189 = scmp.eq.s32.totalorder %s32, 0
      %p190 = por %p188, %p189
      %s192 = sadd.s32 %s191, 1
      %p195 = scmp.eq.s32.totalorder %s26, 1
      %p196 = scmp.ne.s32.totalorder %s191, %s193
      %p197 = scmp.eq.s32.totalorder %s26, 0
      %p198 = por %p196, %p197
      %p199 = scmp.ne.s32.totalorder %s191, %s193
      %p200 = scmp.eq.s32.totalorder %s31, 1
      %p201 = por %p199, %p200
      %p202 = scmp.ne.s32.totalorder %s193, %s194
      %p203 = scmp.eq.s32.totalorder %s31, 0
      %p204 = por %p202, %p203
      %p205 = scmp.ne.s32.totalorder %s193, %s194
      %p206 = scmp.eq.s32.totalorder %s32, 1
      %p207 = por %p205, %p206
      %p209 = scmp.ne.s32.totalorder %s194, %s208
      %p210 = scmp.eq.s32.totalorder %s32, 0
      %p211 = por %p209, %p210
      %s213 = sadd.s32 %s212, 1
      %p216 = scmp.eq.s32.totalorder %s26, 1
      %p217 = scmp.ne.s32.totalorder %s212, %s214
      %p218 = scmp.eq.s32.totalorder %s26, 0
      %p219 = por %p217, %p218
      %p220 = scmp.ne.s32.totalorder %s212, %s214
      %p221 = scmp.eq.s32.totalorder %s31, 1
      %p222 = por %p220, %p221
      %p223 = scmp.ne.s32.totalorder %s214, %s215
      %p224 = scmp.eq.s32.totalorder %s31, 0
      %p225 = por %p223, %p224
      %p226 = scmp.ne.s32.totalorder %s214, %s215
      %p227 = scmp.eq.s32.totalorder %s32, 1
      %p228 = por %p226, %p227
      %p230 = scmp.ne.s32.totalorder %s215, %s229
      %p231 = scmp.eq.s32.totalorder %s32, 0
      %p232 = por %p230, %p231
      %s233 = ssub.s32 %s26, %s33
      %p234 = scmp.eq.s32.totalorder %s233, 0
      %s236 = sadd.s32 %s235, 1
      %s237 = scalar_select %p234, %s235, %s236
      %p240 = pneg %p234
      %p241 = scmp.eq.s32.totalorder %s26, 1
      %p242 = por %p240, %p241
      %p243 = scmp.ne.s32.totalorder %s235, %s238
      %p244 = scmp.eq.s32.totalorder %s26, 0
      %p245 = por %p243, %p244
      %p246 = scmp.ne.s32.totalorder %s235, %s238
      %p247 = scmp.eq.s32.totalorder %s31, 1
      %p248 = por %p246, %p247
      %p249 = scmp.ne.s32.totalorder %s238, %s239
      %p250 = scmp.eq.s32.totalorder %s31, 0
      %p251 = por %p249, %p250
      %p252 = scmp.ne.s32.totalorder %s238, %s239
      %p253 = scmp.eq.s32.totalorder %s32, 1
      %p254 = por %p252, %p253
      %p256 = scmp.ne.s32.totalorder %s239, %s255
      %p257 = scmp.eq.s32.totalorder %s32, 0
      %p258 = por %p256, %p257
      %p259 = scmp.le.s32.totalorder 1, %s26
      %p260 = scmp.lt.s32.totalorder %s26, 3
      %p261 = pnand %p259, %p260
      %p262 = pneg %p261
      // Predicated region
      $region9: #{tpu_custom_call.1} parent=5 // pred_check
        _
      $region10: #{tpu_custom_call.1} parent=5 // pred_check_branch
        %264 = sbr.rel (%p261) target = $region12
      $region11: #{tpu_custom_call.1} parent=5 // pred_region
        %s265 = ssub.s32 %s26, 1
        // Predicated region
        $region13: #{tpu_custom_call.1} parent=11 // pred_check
          %p266 = pneg %p99
        $region14: #{tpu_custom_call.1} parent=11 // pred_check_branch
          %268 = sbr.rel (%p266) target = $region16
        $region15: #{tpu_custom_call.1} parent=11 // pred_region
          %s270 = ssub.s32 2048, 2048
          %271 = vsyncadd [#allocation6], %s270
          %s272 = sshll.u32 [#allocation7], 4
          %s273 = int_to_ptr.vmem [resolvable:$true] %s272
          %278 = dma.hbm_to_vmem [thread:$0]  %s2, 2048, %s273, [#allocation6], 128, 128, 8
        $region16: #{tpu_custom_call.1} parent=11 // pred_fallthru
          _
        // Predicated region
        $region17: #{tpu_custom_call.1} parent=11 // pred_check
          %p279 = pneg %p120
        $region18: #{tpu_custom_call.1} parent=11 // pred_check_branch
          %281 = sbr.rel (%p279) target = $region20
        $region19: #{tpu_custom_call.1} parent=11 // pred_region
          _
        $region20: #{tpu_custom_call.1} parent=11 // pred_fallthru
          _
        // Predicated region
        $region21: #{tpu_custom_call.1} parent=11 // pred_check
          %p282 = pneg %p141
        $region22: #{tpu_custom_call.1} parent=11 // pred_check_branch
          %284 = sbr.rel (%p282) target = $region24
        $region23: #{tpu_custom_call.1} parent=11 // pred_region
          %s286 = ssub.s32 2048, 2048
          %287 = vsyncadd [#allocation9], %s286
          %s288 = sshll.u32 [#allocation8], 4
          %s289 = int_to_ptr.vmem [resolvable:$true] %s288
          %294 = dma.hbm_to_vmem [thread:$0]  %s4, 2048, %s289, [#allocation9], 128, 128, 8
        $region24: #{tpu_custom_call.1} parent=11 // pred_fallthru
          _
        // Predicated region
        $region25: #{tpu_custom_call.1} parent=11 // pred_check
          %p295 = pneg %p162
        $region26: #{tpu_custom_call.1} parent=11 // pred_check_branch
          %297 = sbr.rel (%p295) target = $region28
        $region27: #{tpu_custom_call.1} parent=11 // pred_region
          %s299 = ssub.s32 2048, 2048
          %300 = vsyncadd [#allocation9], %s299
          %s301 = sshll.u32 [#allocation10], 4
          %s302 = int_to_ptr.vmem [resolvable:$true] %s301
          %307 = dma.hbm_to_vmem [thread:$0]  %s5, 2048, %s302, [#allocation9], 128, 128, 8
        $region28: #{tpu_custom_call.1} parent=11 // pred_fallthru
          _
        // Predicated region
        $region29: #{tpu_custom_call.1} parent=11 // pred_check
          %p308 = pneg %p183
        $region30: #{tpu_custom_call.1} parent=11 // pred_check_branch
          %310 = sbr.rel (%p308) target = $region32
        $region31: #{tpu_custom_call.1} parent=11 // pred_region
          _
        $region32: #{tpu_custom_call.1} parent=11 // pred_fallthru
          _
        // Predicated region
        $region33: #{tpu_custom_call.1} parent=11 // pred_check
          %p311 = pneg %p204
        $region34: #{tpu_custom_call.1} parent=11 // pred_check_branch
          %313 = sbr.rel (%p311) target = $region36
        $region35: #{tpu_custom_call.1} parent=11 // pred_region
          %s315 = ssub.s32 2048, 2048
          %316 = vsyncadd [#allocation12], %s315
          %s317 = sshll.u32 [#allocation11], 4
          %s318 = int_to_ptr.vmem [resolvable:$true] %s317
          %323 = dma.hbm_to_vmem [thread:$0]  %s7, 2048, %s318, [#allocation12], 128, 128, 8
        $region36: #{tpu_custom_call.1} parent=11 // pred_fallthru
          _
        // Predicated region
        $region37: #{tpu_custom_call.1} parent=11 // pred_check
          %p324 = pneg %p225
        $region38: #{tpu_custom_call.1} parent=11 // pred_check_branch
          %326 = sbr.rel (%p324) target = $region40
        $region39: #{tpu_custom_call.1} parent=11 // pred_region
          _
        $region40: #{tpu_custom_call.1} parent=11 // pred_fallthru
          _
      $region12: #{tpu_custom_call.1} parent=5 // pred_fallthru
        _
      %p327 = scmp.lt.s32.totalorder %s26, 2
      // Predicated region
      $region41: #{tpu_custom_call.1} parent=5 // pred_check
        %p328 = pneg %p327
      $region42: #{tpu_custom_call.1} parent=5 // pred_check_branch
        %330 = sbr.rel (%p328) target = $region44
      $region43: #{tpu_custom_call.1} parent=5 // pred_region
        // Predicated region
        $region45: #{tpu_custom_call.1} parent=43 // pred_check
          %p331 = pneg %p46
        $region46: #{tpu_custom_call.1} parent=43 // pred_check_branch
          %333 = sbr.rel (%p331) target = $region48
        $region47: #{tpu_custom_call.1} parent=43 // pred_region
          %s334 = sand.u32 %s36, 1
          %s335 = scalar_lea.sflag [#allocation3], %s334
          %s336 = sand.u32 %s36, 1
          %s337 = smul.addr %s336, 16
          %s338 = scalar_lea.vmem [#allocation2], %s337
          %s339 = smul.u32 2, %s26
          %s341 = ssub.s32 256, 256
          %342 = vsyncadd %s335, %s341
          %s343 = smul.addr %s339, 128
          %s344 = scalar_lea.hbm %s0, %s343
          %s345 = sshll.u32 %s338, 4
          %s346 = int_to_ptr.vmem [resolvable:$true] %s345
          %351 = dma.hbm_to_vmem [thread:$0]  %s344, 256, %s346, %s335, 128, 128, 8
        $region48: #{tpu_custom_call.1} parent=43 // pred_fallthru
          _
        // Predicated region
        $region49: #{tpu_custom_call.1} parent=43 // pred_check
          %p352 = pneg %p72
        $region50: #{tpu_custom_call.1} parent=43 // pred_check_branch
          %354 = sbr.rel (%p352) target = $region52
        $region51: #{tpu_custom_call.1} parent=43 // pred_region
          %s355 = sand.u32 %s26, 1
          %s356 = scalar_lea.sflag [#allocation6], %s355
          %s357 = sand.u32 %s62, 1
          %s358 = smul.addr %s357, 16
          %s359 = scalar_lea.vmem [#allocation5], %s358
          %s360 = smul.u32 2, %s26
          %s362 = ssub.s32 256, 256
          %363 = vsyncadd %s356, %s362
          %s364 = smul.addr %s360, 128
          %s365 = scalar_lea.hbm %s1, %s364
          %s366 = sshll.u32 %s359, 4
          %s367 = int_to_ptr.vmem [resolvable:$true] %s366
          %372 = dma.hbm_to_vmem [thread:$0]  %s365, 256, %s367, %s356, 128, 128, 8
        $region52: #{tpu_custom_call.1} parent=43 // pred_fallthru
          _
      $region44: #{tpu_custom_call.1} parent=5 // pred_fallthru
        _
      %p373 = scmp.le.s32.totalorder 1, %s26
      %p374 = scmp.lt.s32.totalorder %s26, 3
      %p375 = pnand %p373, %p374
      %p376 = pneg %p375
      // Predicated region
      $region53: #{tpu_custom_call.1} parent=5 // pred_check
        _
      $region54: #{tpu_custom_call.1} parent=5 // pred_check_branch
        %378 = sbr.rel (%p375) target = $region56
      $region55: #{tpu_custom_call.1} parent=5 // pred_region
        %s379 = ssub.s32 %s26, 1
        %s380 = sand.u32 %s39, 1
        %s381 = scalar_lea.sflag [#allocation3], %s380
        %s382 = sand.u32 %s39, 1
        %s383 = smul.addr %s382, 16
        %s384 = scalar_lea.vmem [#allocation2], %s383
        // Predicated region
        $region57: #{tpu_custom_call.1} parent=55 // pred_check
          %p385 = pneg %p52
        $region58: #{tpu_custom_call.1} parent=55 // pred_check_branch
          %387 = sbr.rel (%p385) target = $region60
        $region59: #{tpu_custom_call.1} parent=55 // pred_region
          %388 = dma.done %s381, 256
        $region60: #{tpu_custom_call.1} parent=55 // pred_fallthru
          _
        %s389 = sand.u32 %s31, 1
        %s390 = scalar_lea.sflag [#allocation6], %s389
        %s391 = sand.u32 %s65, 1
        %s392 = smul.addr %s391, 16
        %s393 = scalar_lea.vmem [#allocation5], %s392
        // Predicated region
        $region61: #{tpu_custom_call.1} parent=55 // pred_check
          %p394 = pneg %p78
        $region62: #{tpu_custom_call.1} parent=55 // pred_check_branch
          %396 = sbr.rel (%p394) target = $region64
        $region63: #{tpu_custom_call.1} parent=55 // pred_region
          %397 = dma.done %s390, 256
        $region64: #{tpu_custom_call.1} parent=55 // pred_fallthru
          _
        // Predicated region
        $region65: #{tpu_custom_call.1} parent=55 // pred_check
          %p398 = pneg %p99
        $region66: #{tpu_custom_call.1} parent=55 // pred_check_branch
          %400 = sbr.rel (%p398) target = $region68
        $region67: #{tpu_custom_call.1} parent=55 // pred_region
          %401 = dma.done [#allocation6], 2048
        $region68: #{tpu_custom_call.1} parent=55 // pred_fallthru
          _
        // Predicated region
        $region69: #{tpu_custom_call.1} parent=55 // pred_check
          %p402 = pneg %p141
        $region70: #{tpu_custom_call.1} parent=55 // pred_check_branch
          %404 = sbr.rel (%p402) target = $region72
        $region71: #{tpu_custom_call.1} parent=55 // pred_region
          %405 = dma.done [#allocation9], 2048
        $region72: #{tpu_custom_call.1} parent=55 // pred_fallthru
          _
        // Predicated region
        $region73: #{tpu_custom_call.1} parent=55 // pred_check
          %p406 = pneg %p162
        $region74: #{tpu_custom_call.1} parent=55 // pred_check_branch
          %408 = sbr.rel (%p406) target = $region76
        $region75: #{tpu_custom_call.1} parent=55 // pred_region
          %409 = dma.done [#allocation9], 2048
        $region76: #{tpu_custom_call.1} parent=55 // pred_fallthru
          _
        // Predicated region
        $region77: #{tpu_custom_call.1} parent=55 // pred_check
          %p410 = pneg %p204
        $region78: #{tpu_custom_call.1} parent=55 // pred_check_branch
          %412 = sbr.rel (%p410) target = $region80
        $region79: #{tpu_custom_call.1} parent=55 // pred_region
          %413 = dma.done [#allocation12], 2048
        $region80: #{tpu_custom_call.1} parent=55 // pred_fallthru
          _
        %s414 = sand.u32 %s39, 1
        %s415 = scalar_lea.sflag [#allocation3], %s414
        %s416 = sand.u32 %s39, 1
        %s417 = smul.addr %s416, 16
        %s418 = scalar_lea.vmem [#allocation2], %s417
        %p419 = pneg %p52
        %p420 = pneg %p49
        %s421 = sand.u32 %s31, 1
        %s422 = scalar_lea.sflag [#allocation6], %s421
        %s423 = sand.u32 %s65, 1
        %s424 = smul.addr %s423, 16
        %s425 = scalar_lea.vmem [#allocation5], %s424
        %p426 = pneg %p78
        %p427 = pneg %p75
        %p428 = pneg %p99
        %p429 = pneg %p96
        %p430 = pneg %p120
        %p431 = pneg %p117
        %p432 = pneg %p141
        %p433 = pneg %p138
        %p434 = pneg %p162
        %p435 = pneg %p159
        %p436 = pneg %p183
        %p437 = pneg %p180
        %p438 = pneg %p204
        %p439 = pneg %p201
        %p440 = pneg %p225
        %p441 = pneg %p222
        %p442 = pneg %p251
        %p443 = pneg %p248
        %s444 = sand.u32 %s238, 1
        %s445 = scalar_lea.sflag [#allocation4], %s444
        %s446 = sand.u32 %s238, 1
        %s447 = smul.addr %s446, 16
        %s448 = scalar_lea.vmem [#allocation13], %s447
        %s449 = smul.u32 2, %s31
        %s450 = smul.u32 2, %s31
        %s451 = smul.u32 2, %s31
        %v452 = vld [vmem:[%s384] sm:$0xff]
        %v453 = vld [vmem:[%s384 + $0x8] sm:$0xff]
        %v454 = vmul.f32 %v452, %v452
        %v455 = vmul.f32 %v453, %v453
        %456 = vadd.xlane.f32.xlu0 %v454
        %v457 = vpop.xlane.xlu0 %456
        %458 = vadd.xlane.f32.xlu0 %v455
        %v459 = vpop.xlane.xlu0 %458
        %v460 = vmul.f32 %v457, 0.03125
        %v461 = vmul.f32 %v459, 0.03125
        %v462 = vadd.f32 %v460, 1e-08
        %v463 = vadd.f32 %v461, 1e-08
        %v464 = vrsqrt.pop %v462
        %v465 = vrsqrt.pop %v463
        %v466 = vmul.f32 %v452, %v464
        %v467 = vmul.f32 %v453, %v465
        %v468 = vld [vmem:[%s393] sm:$0xff]
        %v469 = vld [vmem:[%s393 + $0x8] sm:$0xff]
        %v470 = vmul.f32 %v468, 0.35355338
        %v471 = vmul.f32 %v469, 0.35355338
        %v472 = vld [vmem:[#allocation7] sm:$0xff]
        %v473 = vld [vmem:[#allocation7 + $0x8] sm:$0xff]
        %v474 = vld [vmem:[#allocation7 + $0x10] sm:$0xff]
        %v475 = vld [vmem:[#allocation7 + $0x18] sm:$0xff]
        %v476 = vld [vmem:[#allocation7 + $0x20] sm:$0xff]
        %v477 = vld [vmem:[#allocation7 + $0x28] sm:$0xff]
        %v478 = vld [vmem:[#allocation7 + $0x30] sm:$0xff]
        %v479 = vld [vmem:[#allocation7 + $0x38] sm:$0xff]
        %v480 = vld [vmem:[#allocation7 + $0x40] sm:$0xff]
        %v481 = vld [vmem:[#allocation7 + $0x48] sm:$0xff]
        %v482 = vld [vmem:[#allocation7 + $0x50] sm:$0xff]
        %v483 = vld [vmem:[#allocation7 + $0x58] sm:$0xff]
        %v484 = vld [vmem:[#allocation7 + $0x60] sm:$0xff]
        %v485 = vld [vmem:[#allocation7 + $0x68] sm:$0xff]
        %v486 = vld [vmem:[#allocation7 + $0x70] sm:$0xff]
        %v487 = vld [vmem:[#allocation7 + $0x78] sm:$0xff]
        %v488 = vld [vmem:[%s3] sm:$0x1]
        %v490 = vlaneseq
        %v491 = vshrl.u32 %v490, 7
        %v492 = vsub.s32 0, %v491
        %v493 = vrot.slane %v488, %v492
        %495 = vmatprep.subr.mxu0 0.0
        %496 = vmatpush1.msra.mxu0 %v472
        %497 = vmatprep.subr.mxu0 0.0
        %498 = vmatpush1.msra.mxu0 %v473
        %499 = vmatprep.subr.mxu0 0.0
        %500 = vmatpush1.msra.mxu0 %v474
        %501 = vmatprep.subr.mxu0 0.0
        %502 = vmatpush1.msra.mxu0 %v475
        %503 = vmatprep.subr.mxu0 0.0
        %504 = vmatpush1.msra.mxu0 %v476
        %505 = vmatprep.subr.mxu0 0.0
        %506 = vmatpush1.msra.mxu0 %v477
        %507 = vmatprep.subr.mxu0 0.0
        %508 = vmatpush1.msra.mxu0 %v478
        %509 = vmatprep.subr.mxu0 0.0
        %510 = vmatpush1.msra.mxu0 %v479
        %511 = vmatprep.subr.mxu0 0.0
        %512 = vmatpush1.msra.mxu0 %v480
        %513 = vmatprep.subr.mxu0 0.0
        %514 = vmatpush1.msra.mxu0 %v481
        %515 = vmatprep.subr.mxu0 0.0
        %516 = vmatpush1.msra.mxu0 %v482
        %517 = vmatprep.subr.mxu0 0.0
        %518 = vmatpush1.msra.mxu0 %v483
        %519 = vmatprep.subr.mxu0 0.0
        %520 = vmatpush1.msra.mxu0 %v484
        %521 = vmatprep.subr.mxu0 0.0
        %522 = vmatpush1.msra.mxu0 %v485
        %523 = vmatprep.subr.mxu0 0.0
        %524 = vmatpush1.msra.mxu0 %v486
        %525 = vmatprep.subr.mxu0 0.0
        %526 = vmatpush1.msra.mxu0 %v487
        %527 = vmatprep.subr.mxu0 0.0
        %528 = vmatpush1.msra.mxu0 0.0
        %529 = vmatprep.subr.mxu0 0.0
        %530 = vmatpush1.msra.mxu0 0.0
        %531 = vmatprep.subr.mxu0 0.0
        %532 = vmatpush1.msra.mxu0 0.0
        %533 = vmatprep.subr.mxu0 0.0
        %534 = vmatpush1.msra.mxu0 0.0
        %535 = vmatprep.subr.mxu0 0.0
        %536 = vmatpush1.msra.mxu0 0.0
        %537 = vmatprep.subr.mxu0 0.0
        %538 = vmatpush1.msra.mxu0 0.0
        %539 = vmatprep.subr.mxu0 0.0
        %540 = vmatpush1.msra.mxu0 0.0
        %541 = vmatprep.subr.mxu0 0.0
        %542 = vmatpush1.msra.mxu0 0.0
        %543 = vmatprep.subr.mxu0 0.0
        %544 = vmatpush1.msra.mxu0 0.0
        %545 = vmatprep.subr.mxu0 0.0
        %546 = vmatpush1.msra.mxu0 0.0
        %547 = vmatprep.subr.mxu0 0.0
        %548 = vmatpush1.msra.mxu0 0.0
        %549 = vmatprep.subr.mxu0 0.0
        %550 = vmatpush1.msra.mxu0 0.0
        %551 = vmatprep.subr.mxu0 0.0
        %552 = vmatpush1.msra.mxu0 0.0
        %553 = vmatprep.subr.mxu0 0.0
        %554 = vmatpush1.msra.mxu0 0.0
        %555 = vmatprep.subr.mxu0 0.0
        %556 = vmatpush1.msra.mxu0 0.0
        %557 = vmatprep.subr.mxu0 0.0
        %558 = vmatpush1.msra.mxu0 0.0
        %559 = vmatprep.mubr.f32.mxu0 0.0
        %560 = vmatmul.mubr.f32.gmra.mrb[0].mxu0 %v470
        %v561 = vpop.f32.mrb[0].mxu0
        %v562 = vadd.f32 %v493, %v561
        %v563 = vpop.f32.mrb[0].mxu0
        %564 = vmatprep.mubr.f32.mxu0 0.0
        %565 = vmatmul.mubr.f32.gmra.mrb[0].mxu0 %v471
        %v566 = vpop.f32.mrb[0].mxu0
        %v567 = vadd.f32 %v493, %v566
        %v568 = vpop.f32.mrb[0].mxu0
        %569 = vdwg.mxu0
        %v570 = vmul.f32 %v562, %v562
        %v571 = vmul.f32 %v567, %v567
        %572 = vadd.xlane.f32.xlu0 %v570
        %v573 = vpop.xlane.xlu0 %572
        %574 = vadd.xlane.f32.xlu0 %v571
        %v575 = vpop.xlane.xlu0 %574
        %v576 = vmul.f32 %v573, 0.03125
        %v577 = vmul.f32 %v575, 0.03125
        %v578 = vadd.f32 %v576, 1e-08
        %v579 = vadd.f32 %v577, 1e-08
        %v580 = vrsqrt.pop %v578
        %v581 = vrsqrt.pop %v579
        %v582 = vmul.f32 %v562, %v580
        %v583 = vmul.f32 %v567, %v581
        %v584 = vmul.f32 %v466, 0.00125
        %v585 = vmul.f32 %v467, 0.00125
        %v586 = vld [vmem:[#allocation8] sm:$0xff]
        %v587 = vld [vmem:[#allocation8 + $0x8] sm:$0xff]
        %v588 = vld [vmem:[#allocation8 + $0x10] sm:$0xff]
        %v589 = vld [vmem:[#allocation8 + $0x18] sm:$0xff]
        %v590 = vld [vmem:[#allocation8 + $0x20] sm:$0xff]
        %v591 = vld [vmem:[#allocation8 + $0x28] sm:$0xff]
        %v592 = vld [vmem:[#allocation8 + $0x30] sm:$0xff]
        %v593 = vld [vmem:[#allocation8 + $0x38] sm:$0xff]
        %v594 = vld [vmem:[#allocation8 + $0x40] sm:$0xff]
        %v595 = vld [vmem:[#allocation8 + $0x48] sm:$0xff]
        %v596 = vld [vmem:[#allocation8 + $0x50] sm:$0xff]
        %v597 = vld [vmem:[#allocation8 + $0x58] sm:$0xff]
        %v598 = vld [vmem:[#allocation8 + $0x60] sm:$0xff]
        %v599 = vld [vmem:[#allocation8 + $0x68] sm:$0xff]
        %v600 = vld [vmem:[#allocation8 + $0x70] sm:$0xff]
        %v601 = vld [vmem:[#allocation8 + $0x78] sm:$0xff]
        %v602 = vmul.f32 %v582, 0.00125
        %v603 = vmul.f32 %v583, 0.00125
        %v604 = vld [vmem:[#allocation10] sm:$0xff]
        %v605 = vld [vmem:[#allocation10 + $0x8] sm:$0xff]
        %v606 = vld [vmem:[#allocation10 + $0x10] sm:$0xff]
        %v607 = vld [vmem:[#allocation10 + $0x18] sm:$0xff]
        %v608 = vld [vmem:[#allocation10 + $0x20] sm:$0xff]
        %v609 = vld [vmem:[#allocation10 + $0x28] sm:$0xff]
        %v610 = vld [vmem:[#allocation10 + $0x30] sm:$0xff]
        %v611 = vld [vmem:[#allocation10 + $0x38] sm:$0xff]
        %v612 = vld [vmem:[#allocation10 + $0x40] sm:$0xff]
        %v613 = vld [vmem:[#allocation10 + $0x48] sm:$0xff]
        %v614 = vld [vmem:[#allocation10 + $0x50] sm:$0xff]
        %v615 = vld [vmem:[#allocation10 + $0x58] sm:$0xff]
        %v616 = vld [vmem:[#allocation10 + $0x60] sm:$0xff]
        %v617 = vld [vmem:[#allocation10 + $0x68] sm:$0xff]
        %v618 = vld [vmem:[#allocation10 + $0x70] sm:$0xff]
        %v619 = vld [vmem:[#allocation10 + $0x78] sm:$0xff]
        %620 = vmatprep.subr.mxu0 0.0
        %621 = vmatpush1.msra.mxu0 %v604
        %622 = vmatprep.subr.mxu0 0.0
        %623 = vmatpush1.msra.mxu0 %v605
        %624 = vmatprep.subr.mxu0 0.0
        %625 = vmatpush1.msra.mxu0 %v606
        %626 = vmatprep.subr.mxu0 0.0
        %627 = vmatpush1.msra.mxu0 %v607
        %628 = vmatprep.subr.mxu0 0.0
        %629 = vmatpush1.msra.mxu0 %v608
        %630 = vmatprep.subr.mxu0 0.0
        %631 = vmatpush1.msra.mxu0 %v609
        %632 = vmatprep.subr.mxu0 0.0
        %633 = vmatpush1.msra.mxu0 %v610
        %634 = vmatprep.subr.mxu0 0.0
        %635 = vmatpush1.msra.mxu0 %v611
        %636 = vmatprep.subr.mxu0 0.0
        %637 = vmatpush1.msra.mxu0 %v612
        %638 = vmatprep.subr.mxu0 0.0
        %639 = vmatpush1.msra.mxu0 %v613
        %640 = vmatprep.subr.mxu0 0.0
        %641 = vmatpush1.msra.mxu0 %v614
        %642 = vmatprep.subr.mxu0 0.0
        %643 = vmatpush1.msra.mxu0 %v615
        %644 = vmatprep.subr.mxu0 0.0
        %645 = vmatpush1.msra.mxu0 %v616
        %646 = vmatprep.subr.mxu0 0.0
        %647 = vmatpush1.msra.mxu0 %v617
        %648 = vmatprep.subr.mxu0 0.0
        %649 = vmatpush1.msra.mxu0 %v618
        %650 = vmatprep.subr.mxu0 0.0
        %651 = vmatpush1.msra.mxu0 %v619
        %652 = vmatprep.subr.mxu0 0.0
        %653 = vmatpush1.msra.mxu0 0.0
        %654 = vmatprep.subr.mxu0 0.0
        %655 = vmatpush1.msra.mxu0 0.0
        %656 = vmatprep.subr.mxu0 0.0
        %657 = vmatpush1.msra.mxu0 0.0
        %658 = vmatprep.subr.mxu0 0.0
        %659 = vmatpush1.msra.mxu0 0.0
        %660 = vmatprep.subr.mxu0 0.0
        %661 = vmatpush1.msra.mxu0 0.0
        %662 = vmatprep.subr.mxu0 0.0
        %663 = vmatpush1.msra.mxu0 0.0
        %664 = vmatprep.subr.mxu0 0.0
        %665 = vmatpush1.msra.mxu0 0.0
        %666 = vmatprep.subr.mxu0 0.0
        %667 = vmatpush1.msra.mxu0 0.0
        %668 = vmatprep.subr.mxu0 0.0
        %669 = vmatpush1.msra.mxu0 0.0
        %670 = vmatprep.subr.mxu0 0.0
        %671 = vmatpush1.msra.mxu0 0.0
        %672 = vmatprep.subr.mxu0 0.0
        %673 = vmatpush1.msra.mxu0 0.0
        %674 = vmatprep.subr.mxu0 0.0
        %675 = vmatpush1.msra.mxu0 0.0
        %676 = vmatprep.subr.mxu0 0.0
        %677 = vmatpush1.msra.mxu0 0.0
        %678 = vmatprep.subr.mxu0 0.0
        %679 = vmatpush1.msra.mxu0 0.0
        %680 = vmatprep.subr.mxu0 0.0
        %681 = vmatpush1.msra.mxu0 0.0
        %682 = vmatprep.subr.mxu0 0.0
        %683 = vmatpush1.msra.mxu0 0.0
        %684 = vmatprep.mubr.f32.mxu0 0.0
        %685 = vmatmul.mubr.f32.gmra.mrb[0].mxu0 %v602
        %v686 = vpop.f32.mrb[0].mxu0
        %v687 = vadd.f32 0.0, %v686
        %v688 = vpop.f32.mrb[0].mxu0
        %689 = vmatprep.mubr.f32.mxu0 0.0
        %690 = vmatmul.mubr.f32.gmra.mrb[0].mxu0 %v603
        %v691 = vpop.f32.mrb[0].mxu0
        %v692 = vadd.f32 0.0, %v691
        %v693 = vpop.f32.mrb[0].mxu0
        %694 = vdwg.mxu0
        %695 = vmatprep.subr.mxu0 0.0
        %696 = vmatpush1.msra.mxu0 %v586
        %697 = vmatprep.subr.mxu0 0.0
        %698 = vmatpush1.msra.mxu0 %v587
        %699 = vmatprep.subr.mxu0 0.0
        %700 = vmatpush1.msra.mxu0 %v588
        %701 = vmatprep.subr.mxu0 0.0
        %702 = vmatpush1.msra.mxu0 %v589
        %703 = vmatprep.subr.mxu0 0.0
        %704 = vmatpush1.msra.mxu0 %v590
        %705 = vmatprep.subr.mxu0 0.0
        %706 = vmatpush1.msra.mxu0 %v591
        %707 = vmatprep.subr.mxu0 0.0
        %708 = vmatpush1.msra.mxu0 %v592
        %709 = vmatprep.subr.mxu0 0.0
        %710 = vmatpush1.msra.mxu0 %v593
        %711 = vmatprep.subr.mxu0 0.0
        %712 = vmatpush1.msra.mxu0 %v594
        %713 = vmatprep.subr.mxu0 0.0
        %714 = vmatpush1.msra.mxu0 %v595
        %715 = vmatprep.subr.mxu0 0.0
        %716 = vmatpush1.msra.mxu0 %v596
        %717 = vmatprep.subr.mxu0 0.0
        %718 = vmatpush1.msra.mxu0 %v597
        %719 = vmatprep.subr.mxu0 0.0
        %720 = vmatpush1.msra.mxu0 %v598
        %721 = vmatprep.subr.mxu0 0.0
        %722 = vmatpush1.msra.mxu0 %v599
        %723 = vmatprep.subr.mxu0 0.0
        %724 = vmatpush1.msra.mxu0 %v600
        %725 = vmatprep.subr.mxu0 0.0
        %726 = vmatpush1.msra.mxu0 %v601
        %727 = vmatprep.subr.mxu0 0.0
        %728 = vmatpush1.msra.mxu0 0.0
        %729 = vmatprep.subr.mxu0 0.0
        %730 = vmatpush1.msra.mxu0 0.0
        %731 = vmatprep.subr.mxu0 0.0
        %732 = vmatpush1.msra.mxu0 0.0
        %733 = vmatprep.subr.mxu0 0.0
        %734 = vmatpush1.msra.mxu0 0.0
        %735 = vmatprep.subr.mxu0 0.0
        %736 = vmatpush1.msra.mxu0 0.0
        %737 = vmatprep.subr.mxu0 0.0
        %738 = vmatpush1.msra.mxu0 0.0
        %739 = vmatprep.subr.mxu0 0.0
        %740 = vmatpush1.msra.mxu0 0.0
        %741 = vmatprep.subr.mxu0 0.0
        %742 = vmatpush1.msra.mxu0 0.0
        %743 = vmatprep.subr.mxu0 0.0
        %744 = vmatpush1.msra.mxu0 0.0
        %745 = vmatprep.subr.mxu0 0.0
        %746 = vmatpush1.msra.mxu0 0.0
        %747 = vmatprep.subr.mxu0 0.0
        %748 = vmatpush1.msra.mxu0 0.0
        %749 = vmatprep.subr.mxu0 0.0
        %750 = vmatpush1.msra.mxu0 0.0
        %751 = vmatprep.subr.mxu0 0.0
        %752 = vmatpush1.msra.mxu0 0.0
        %753 = vmatprep.subr.mxu0 0.0
        %754 = vmatpush1.msra.mxu0 0.0
        %755 = vmatprep.subr.mxu0 0.0
        %756 = vmatpush1.msra.mxu0 0.0
        %757 = vmatprep.subr.mxu0 0.0
        %758 = vmatpush1.msra.mxu0 0.0
        %759 = vmatprep.mubr.f32.mxu0 0.0
        %760 = vmatmul.mubr.f32.gmra.mrb[0].mxu0 %v584
        %v761 = vpop.f32.mrb[0].mxu0
        %v762 = vadd.f32 %v687, %v761
        %v763 = vpop.f32.mrb[0].mxu0
        %764 = vmatprep.mubr.f32.mxu0 0.0
        %765 = vmatmul.mubr.f32.gmra.mrb[0].mxu0 %v585
        %v766 = vpop.f32.mrb[0].mxu0
        %v767 = vadd.f32 %v692, %v766
        %v768 = vpop.f32.mrb[0].mxu0
        %769 = vdwg.mxu0
        %v770 = vld [vmem:[%s6] sm:$0x1]
        %v772 = vlaneseq
        %v773 = vshrl.u32 %v772, 7
        %v774 = vsub.s32 0, %v773
        %v775 = vrot.slane %v770, %v774
        %v777 = vadd.f32 %v762, %v775
        %v778 = vadd.f32 %v767, %v775
        %vm779 = vcmp.ge.f32.partialorder %v777, 0.0
        %vm780 = vcmp.ge.f32.partialorder %v778, 0.0
        %v781 = vmul.f32 %v777, 0.2
        %v782 = vmul.f32 %v778, 0.2
        %v783 = vsel %vm779, %v777, %v781
        %v784 = vsel %vm780, %v778, %v782
        %v785 = vmul.f32 %v783, 0.0017677669
        %v786 = vmul.f32 %v784, 0.0017677669
        %v787 = vld [vmem:[#allocation11] sm:$0xff]
        %v788 = vld [vmem:[#allocation11 + $0x8] sm:$0xff]
        %v789 = vld [vmem:[#allocation11 + $0x10] sm:$0xff]
        %v790 = vld [vmem:[#allocation11 + $0x18] sm:$0xff]
        %v791 = vld [vmem:[#allocation11 + $0x20] sm:$0xff]
        %v792 = vld [vmem:[#allocation11 + $0x28] sm:$0xff]
        %v793 = vld [vmem:[#allocation11 + $0x30] sm:$0xff]
        %v794 = vld [vmem:[#allocation11 + $0x38] sm:$0xff]
        %v795 = vld [vmem:[#allocation11 + $0x40] sm:$0xff]
        %v796 = vld [vmem:[#allocation11 + $0x48] sm:$0xff]
        %v797 = vld [vmem:[#allocation11 + $0x50] sm:$0xff]
        %v798 = vld [vmem:[#allocation11 + $0x58] sm:$0xff]
        %v799 = vld [vmem:[#allocation11 + $0x60] sm:$0xff]
        %v800 = vld [vmem:[#allocation11 + $0x68] sm:$0xff]
        %v801 = vld [vmem:[#allocation11 + $0x70] sm:$0xff]
        %v802 = vld [vmem:[#allocation11 + $0x78] sm:$0xff]
        %v803 = vld [vmem:[%s8] sm:$0x1]
        %v805 = vlaneseq
        %v806 = vshrl.u32 %v805, 7
        %v807 = vsub.s32 0, %v806
        %v808 = vrot.slane %v803, %v807
        %810 = vmatprep.subr.mxu0 0.0
        %811 = vmatpush1.msra.mxu0 %v787
        %812 = vmatprep.subr.mxu0 0.0
        %813 = vmatpush1.msra.mxu0 %v788
        %814 = vmatprep.subr.mxu0 0.0
        %815 = vmatpush1.msra.mxu0 %v789
        %816 = vmatprep.subr.mxu0 0.0
        %817 = vmatpush1.msra.mxu0 %v790
        %818 = vmatprep.subr.mxu0 0.0
        %819 = vmatpush1.msra.mxu0 %v791
        %820 = vmatprep.subr.mxu0 0.0
        %821 = vmatpush1.msra.mxu0 %v792
        %822 = vmatprep.subr.mxu0 0.0
        %823 = vmatpush1.msra.mxu0 %v793
        %824 = vmatprep.subr.mxu0 0.0
        %825 = vmatpush1.msra.mxu0 %v794
        %826 = vmatprep.subr.mxu0 0.0
        %827 = vmatpush1.msra.mxu0 %v795
        %828 = vmatprep.subr.mxu0 0.0
        %829 = vmatpush1.msra.mxu0 %v796
        %830 = vmatprep.subr.mxu0 0.0
        %831 = vmatpush1.msra.mxu0 %v797
        %832 = vmatprep.subr.mxu0 0.0
        %833 = vmatpush1.msra.mxu0 %v798
        %834 = vmatprep.subr.mxu0 0.0
        %835 = vmatpush1.msra.mxu0 %v799
        %836 = vmatprep.subr.mxu0 0.0
        %837 = vmatpush1.msra.mxu0 %v800
        %838 = vmatprep.subr.mxu0 0.0
        %839 = vmatpush1.msra.mxu0 %v801
        %840 = vmatprep.subr.mxu0 0.0
        %841 = vmatpush1.msra.mxu0 %v802
        %842 = vmatprep.subr.mxu0 0.0
        %843 = vmatpush1.msra.mxu0 0.0
        %844 = vmatprep.subr.mxu0 0.0
        %845 = vmatpush1.msra.mxu0 0.0
        %846 = vmatprep.subr.mxu0 0.0
        %847 = vmatpush1.msra.mxu0 0.0
        %848 = vmatprep.subr.mxu0 0.0
        %849 = vmatpush1.msra.mxu0 0.0
        %850 = vmatprep.subr.mxu0 0.0
        %851 = vmatpush1.msra.mxu0 0.0
        %852 = vmatprep.subr.mxu0 0.0
        %853 = vmatpush1.msra.mxu0 0.0
        %854 = vmatprep.subr.mxu0 0.0
        %855 = vmatpush1.msra.mxu0 0.0
        %856 = vmatprep.subr.mxu0 0.0
        %857 = vmatpush1.msra.mxu0 0.0
        %858 = vmatprep.subr.mxu0 0.0
        %859 = vmatpush1.msra.mxu0 0.0
        %860 = vmatprep.subr.mxu0 0.0
        %861 = vmatpush1.msra.mxu0 0.0
        %862 = vmatprep.subr.mxu0 0.0
        %863 = vmatpush1.msra.mxu0 0.0
        %864 = vmatprep.subr.mxu0 0.0
        %865 = vmatpush1.msra.mxu0 0.0
        %866 = vmatprep.subr.mxu0 0.0
        %867 = vmatpush1.msra.mxu0 0.0
        %868 = vmatprep.subr.mxu0 0.0
        %869 = vmatpush1.msra.mxu0 0.0
        %870 = vmatprep.subr.mxu0 0.0
        %871 = vmatpush1.msra.mxu0 0.0
        %872 = vmatprep.subr.mxu0 0.0
        %873 = vmatpush1.msra.mxu0 0.0
        %874 = vmatprep.mubr.f32.mxu0 0.0
        %875 = vmatmul.mubr.f32.gmra.mrb[0].mxu0 %v785
        %v876 = vpop.f32.mrb[0].mxu0
        %v877 = vadd.f32 %v808, %v876
        %v878 = vpop.f32.mrb[0].mxu0
        %879 = vmatprep.mubr.f32.mxu0 0.0
        %880 = vmatmul.mubr.f32.gmra.mrb[0].mxu0 %v786
        %v881 = vpop.f32.mrb[0].mxu0
        %v882 = vadd.f32 %v808, %v881
        %v883 = vpop.f32.mrb[0].mxu0
        %884 = vdwg.mxu0
        %vm885 = vcmp.ge.f32.partialorder %v877, 0.0
        %vm886 = vcmp.ge.f32.partialorder %v882, 0.0
        %v887 = vmul.f32 %v877, 0.2
        %v888 = vmul.f32 %v882, 0.2
        %v889 = vsel %vm885, %v877, %v887
        %v890 = vsel %vm886, %v882, %v888
        %891 = vst [vmem:[%s448] sm:$0xff] %v889
        %892 = vst [vmem:[%s448 + $0x8] sm:$0xff] %v890
        %s893 = sand.u32 %s238, 1
        %s894 = scalar_lea.sflag [#allocation4], %s893
        %s895 = sand.u32 %s238, 1
        %s896 = smul.addr %s895, 16
        %s897 = scalar_lea.vmem [#allocation13], %s896
        // Predicated region
        $region81: #{tpu_custom_call.1} parent=55 // pred_check
          %p898 = pneg %p248
        $region82: #{tpu_custom_call.1} parent=55 // pred_check_branch
          %900 = sbr.rel (%p898) target = $region84
        $region83: #{tpu_custom_call.1} parent=55 // pred_region
          %s901 = smul.u32 2, %s31
          %s903 = ssub.s32 256, 256
          %904 = vsyncadd %s894, %s903
          %s905 = smul.addr %s901, 128
          %s906 = scalar_lea.hbm %s9, %s905
          %s907 = sshll.u32 %s897, 4
          %s908 = int_to_ptr.vmem [resolvable:$true] %s907
          %913 = dma.vmem_to_hbm [thread:$0]  %s908, 256, %s906, %s894, 128, 128, 8
        $region84: #{tpu_custom_call.1} parent=55 // pred_fallthru
          _
      $region56: #{tpu_custom_call.1} parent=5 // pred_fallthru
        _
      %p914 = scmp.le.s32.totalorder 2, %s26
      // Predicated region
      $region85: #{tpu_custom_call.1} parent=5 // pred_check
        %p915 = pneg %p914
      $region86: #{tpu_custom_call.1} parent=5 // pred_check_branch
        %917 = sbr.rel (%p915) target = $region88
      $region87: #{tpu_custom_call.1} parent=5 // pred_region
        %s918 = ssub.s32 %s26, 2
        // Predicated region
        $region89: #{tpu_custom_call.1} parent=87 // pred_check
          %p919 = pneg %p254
        $region90: #{tpu_custom_call.1} parent=87 // pred_check_branch
          %921 = sbr.rel (%p919) target = $region92
        $region91: #{tpu_custom_call.1} parent=87 // pred_region
          %s922 = sand.u32 %s239, 1
          %s923 = scalar_lea.sflag [#allocation4], %s922
          %s924 = sand.u32 %s239, 1
          %s925 = smul.addr %s924, 16
          %s926 = scalar_lea.vmem [#allocation13], %s925
          %927 = dma.done %s923, 256
        $region92: #{tpu_custom_call.1} parent=87 // pred_fallthru
          _
      $region88: #{tpu_custom_call.1} parent=5 // pred_fallthru
        _
    $region6: #{tpu_custom_call.1} parent=1 // loop_footer
      %s30 = sadd.s32 1, %s26
    $region7: #{tpu_custom_call.1} parent=1 // loop_footer_branch
      %25 = sbr.rel target = $region3
    $region8: #{tpu_custom_call.1} parent=1 // loop_exit
      _
    %928 = vsyncpa [#allocation3], 1
    %s929 = scalar_lea.sflag [#allocation3], 1
    %930 = vsyncpa %s929, 1
    %931 = vsyncpa [#allocation6], 1
    %s932 = scalar_lea.sflag [#allocation6], 1
    %933 = vsyncpa %s932, 1
    %934 = vsyncpa [#allocation9], 1
    %935 = vsyncpa [#allocation12], 1
    %936 = vsyncpa [#allocation4], 1
    %s937 = scalar_lea.sflag [#allocation4], 1
    %938 = vsyncpa %s937, 1

</llo_original>
